<compile_context>
chip_gen: v6e
topology: v6e:2x2x1
jax: 0.10.0
libtpu: 0.0.40
codegen_flags: <defaults>
</compile_context>

<pallas_src>
import jax
import jax.numpy as jnp
from jax.experimental import pallas as pl
from jax.experimental.pallas import tpu as pltpu


SUBLANE = 8                          # row granularity for the (8, 128) block rule
_VMEM_BUDGET = 24 * 1024 * 1024      # stay inside default scoped VMEM on all chips


def _round_up(x, m):
    return (x + m - 1) // m * m


def _pick_tm(n_rows, e, requested=None):
    """Row-tile size: big blocks amortize per-step overhead; keep >=8 tiles for
    large inputs (v7x megacore + pipeline slack); respect a VMEM budget."""
    n8 = _round_up(max(n_rows, 1), SUBLANE)
    if requested is not None:
        tm = _round_up(max(SUBLANE, min(int(requested), n8)), SUBLANE)
    elif n8 <= 1024:
        tm = n8
    else:
        tm = min(2048, max(1024, _round_up(pl.cdiv(n8, 8), SUBLANE)))
    # VMEM: (x + out) double-buffered (4 row tiles, f32) + resident weight/bias.
    row_bytes = 4 * e * 4
    weight_bytes = 4 * (e * e + e)
    max_tm = max(SUBLANE,
                 ((_VMEM_BUDGET - weight_bytes) // row_bytes) // SUBLANE * SUBLANE)
    return max(SUBLANE, min(tm, max_tm))


def _make_kernel(drop_p, branch_tag, tm, n_cols):
    """Fused (linear + inverted dropout) kernel for one row tile.

    Refs (after the 1 scalar-prefetch ref):
      seed_ref : SMEM [1]        int32  dropout seed
      x_ref    : VMEM [tm, e]           input rows
      w_ref    : VMEM [e, e]            pre-transposed weight (VMEM-resident)
      b_ref    : VMEM [1, e]            bias (VMEM-resident)
      o_ref    : VMEM [tm, e]           output rows
    """
    drop_p = float(drop_p)
    inv_keep = 1.0 / (1.0 - drop_p) if drop_p < 1.0 else 0.0
    branch_mix = (0x9E3779B9 * (branch_tag + 1)) & 0xFFFFFFFF

    def kernel(seed_ref, x_ref, w_ref, b_ref, o_ref):
        # y = x @ W.T + b   (W already transposed in the wrapper -> plain x @ w)
        y = jnp.dot(x_ref[...], w_ref[...],
                    preferred_element_type=jnp.float32) + b_ref[...]

        if drop_p >= 1.0:
            y = jnp.zeros_like(y)
        elif drop_p > 0.0:
            # Stateless inverted dropout: hash(global element index ^ seed).
            # Plain uint32 VPU ops (no hardware PRNG) -> portable, and the mask
            # does not depend on the tiling or on which core runs the tile.
            rows = jax.lax.broadcasted_iota(jnp.int32, y.shape, 0).astype(jnp.uint32)
            cols = jax.lax.broadcasted_iota(jnp.int32, y.shape, 1).astype(jnp.uint32)
            base = (pl.program_id(0) * tm).astype(jnp.uint32)
            idx = (base + rows) * jnp.uint32(n_cols) + cols
            seed_u = seed_ref[0].astype(jnp.uint32) ^ jnp.uint32(branch_mix)
            h = idx ^ seed_u
            h = (h ^ (h >> 16)) * jnp.uint32(0x7FEB352D)   # lowbias32-style mixer
            h = (h ^ (h >> 15)) * jnp.uint32(0x846CA68B)
            h = h ^ (h >> 16)
            # top 24 bits -> uniform in [0, 1)
            u = (h >> 8).astype(jnp.int32).astype(jnp.float32) * jnp.float32(1.0 / (1 << 24))
            keep = (u >= jnp.float32(drop_p)).astype(jnp.float32)
            y = y * (keep * jnp.float32(inv_keep))          # mask-multiply, no select

        o_ref[...] = y.astype(o_ref.dtype)

    return kernel


def _linear_dropout(x, w, b, *, drop_p, seed, branch_tag, tm=None):
    """dropout(x @ W.T + b, drop_p) for one branch, as a single pallas_call."""
    f32 = jnp.float32
    x = jnp.asarray(x, f32)
    n, e = x.shape
    wt = jnp.asarray(w, f32).T               # PyTorch [out, in] -> [in, out], once
    b2 = jnp.asarray(b, f32).reshape(1, e)
    seed_arr = jnp.asarray([seed], jnp.int32)

    tm = _pick_tm(n, e, tm)
    grid = (pl.cdiv(n, tm),)                 # partial last block handled by Pallas

    kernel = _make_kernel(drop_p, branch_tag, tm, e)

    cost = pl.CostEstimate(
        flops=int(2 * n * e * e),
        transcendentals=0,
        bytes_accessed=int(4 * (2 * n * e + e * e + e)),
    )

    return pl.pallas_call(
        kernel,
        out_shape=jax.ShapeDtypeStruct((n, e), f32),
        grid_spec=pltpu.PrefetchScalarGridSpec(
            num_scalar_prefetch=1,                          # seed -> SMEM
            grid=grid,
            in_specs=[
                pl.BlockSpec((tm, e), lambda i, sd: (i, 0)),  # pipelined row tiles
                pl.BlockSpec((e, e), lambda i, sd: (0, 0)),   # weight: loaded once
                pl.BlockSpec((1, e), lambda i, sd: (0, 0)),   # bias:   loaded once
            ],
            out_specs=pl.BlockSpec((tm, e), lambda i, sd: (i, 0)),
        ),
        compiler_params=pltpu.CompilerParams(
            dimension_semantics=("parallel",),              # independent row tiles
        ),
        cost_estimate=cost,
    )(seed_arr, x, wt, b2)


def prompt_learner_forward(params, user_hard_token, item_hard_token,
                           drop_p=0.0, seed=0, tm=None):
    """Forward: (dropout(trans_user(user_tok), p), dropout(trans_item(item_tok), p))."""
    user = _linear_dropout(user_hard_token, params["trans_user_w"],
                           params["trans_user_b"], drop_p=drop_p, seed=seed,
                           branch_tag=0, tm=tm)
    item = _linear_dropout(item_hard_token, params["trans_item_w"],
                           params["trans_item_b"], drop_p=drop_p, seed=seed,
                           branch_tag=1, tm=tm)
    return user, item


if __name__ == "__main__":
    embed_size = 32
    n_items = 10
    n_users = 12
    drop_p = 0.25

    key = jax.random.PRNGKey(0)
    k_img, k_txt, k_g, k_wu, k_bu, k_wi, k_bi = jax.random.split(key, 7)

    # ---- __init__ preprocessing in plain JAX (PCA/ICA/Isomap + pickle I/O
    # replaced by synthetic hard tokens at embed_size). ----
    hard_token_image = jax.random.normal(k_img, (n_items, embed_size), jnp.float32)
    hard_token_text = jax.random.normal(k_txt, (n_items, embed_size), jnp.float32)
    item_hard_token = jnp.mean(jnp.stack([hard_token_image, hard_token_text]), axis=0)
    ui_graph = jax.random.uniform(k_g, (n_users, n_items), jnp.float32)
    user_hard_token = ui_graph @ item_hard_token

    bound = 1.0 / float(jnp.sqrt(jnp.float32(embed_size)))
    params = {
        "trans_user_w": jax.random.uniform(k_wu, (embed_size, embed_size),
                                           jnp.float32, -bound, bound),
        "trans_user_b": jax.random.uniform(k_bu, (embed_size,),
                                           jnp.float32, -bound, bound),
        "trans_item_w": jax.random.uniform(k_wi, (embed_size, embed_size),
                                           jnp.float32, -bound, bound),
        "trans_item_b": jax.random.uniform(k_bi, (embed_size,),
                                           jnp.float32, -bound, bound),
    }

    # Reference linear outputs (nn.Linear semantics: x @ W.T + b).
    ref_user = user_hard_token @ params["trans_user_w"].T + params["trans_user_b"][None, :]
    ref_item = item_hard_token @ params["trans_item_w"].T + params["trans_item_b"][None, :]

    # 1) p = 0: dropout is the identity -> exact match with the linear reference.
    u0, i0 = prompt_learner_forward(params, user_hard_token, item_hard_token, drop_p=0.0)
    jax.block_until_ready((u0, i0))
    assert u0.shape == (n_users, embed_size) and i0.shape == (n_items, embed_size)
    assert jnp.allclose(u0, ref_user, atol=1e-5, rtol=1e-5)
    assert jnp.allclose(i0, ref_item, atol=1e-5, rtol=1e-5)

    # 2) p > 0: every output element is either 0 or ref / (1 - p) (inverted dropout).
    u1, i1 = prompt_learner_forward(params, user_hard_token, item_hard_token,
                                    drop_p=drop_p, seed=123)
    jax.block_until_ready((u1, i1))
    scale = 1.0 / (1.0 - drop_p)
    for got, ref in ((u1, ref_user), (i1, ref_item)):
        is_zero = jnp.isclose(got, 0.0, atol=1e-6)
        is_scaled = jnp.isclose(got, ref * scale, atol=1e-4, rtol=1e-4)
        assert bool(jnp.all(is_zero | is_scaled))

    print("KERNEL_OK")
</pallas_src>

<mosaic_0001>
module attributes {stable_mosaic.version = 11 : i64} {
  func.func @kernel(%arg0: i32, %arg1: memref<1xi32, #tpu.memory_space<smem>>, %arg2: memref<16x32xf32, #tpu.memory_space<vmem>>, %arg3: memref<32x32xf32, #tpu.memory_space<vmem>>, %arg4: memref<1x32xf32, #tpu.memory_space<vmem>>, %arg5: memref<16x32xf32, #tpu.memory_space<vmem>>) attributes {dimension_semantics = [#tpu.dimension_semantics<parallel>], iteration_bounds = array<i64: 1>, scalar_prefetch = 1 : i64, scratch_operands = 0 : i64, tpu.core_type = #tpu.core_type<tc>, window_params = [{transform_indices = @transform_0, window_bounds = array<i64: 16, 32>}, {pipeline_mode = #tpu.pipeline_mode<synchronous>, transform_indices = @transform_1, window_bounds = array<i64: 32, 32>}, {pipeline_mode = #tpu.pipeline_mode<synchronous>, transform_indices = @transform_2, window_bounds = array<i64: 1, 32>}, {transform_indices = @transform_3, window_bounds = array<i64: 16, 32>}]} {
    %c0 = arith.constant 0 : index
    %c0_0 = arith.constant 0 : index
    %0 = vector.load %arg2[%c0, %c0_0] : memref<16x32xf32, #tpu.memory_space<vmem>>, vector<16x32xf32>
    %c0_1 = arith.constant 0 : index
    %c0_2 = arith.constant 0 : index
    %1 = vector.load %arg3[%c0_1, %c0_2] : memref<32x32xf32, #tpu.memory_space<vmem>>, vector<32x32xf32>
    %cst = arith.constant dense<0.000000e+00> : vector<16x32xf32>
    %2 = tpu.matmul %0, %1, %cst {dimension_numbers = #tpu.dot_dimension_numbers<[1], [0], [0], [1], [0, 0, 1, 1], [], []>} : vector<16x32xf32>, vector<32x32xf32>, vector<16x32xf32> -> vector<16x32xf32>
    %c0_3 = arith.constant 0 : index
    %c0_4 = arith.constant 0 : index
    %3 = vector.load %arg4[%c0_3, %c0_4] : memref<1x32xf32, #tpu.memory_space<vmem>>, vector<1x32xf32>
    %4 = vector.broadcast %3 : vector<1x32xf32> to vector<16x32xf32>
    %5 = arith.addf %2, %4 : vector<16x32xf32>
    %c0_5 = arith.constant 0 : index
    %c0_6 = arith.constant 0 : index
    %6 = vector.load %arg5[%c0_5, %c0_6] : memref<16x32xf32, #tpu.memory_space<vmem>>, vector<16x32xf32>
    tpu.vector_store %arg5[%c0_5, %c0_6], %5 {strides = array<i32>} : memref<16x32xf32, #tpu.memory_space<vmem>>, vector<16x32xf32>,
    return
  }
  func.func @transform_0(%arg0: i32, %arg1: memref<1xi32, #tpu.memory_space<smem>>) -> (i32, i32) {
    %c0_i32 = arith.constant 0 : i32
    %c0_i32_0 = arith.constant 0 : i32
    return %arg0, %c0_i32 : i32, i32
  }
  func.func @transform_1(%arg0: i32, %arg1: memref<1xi32, #tpu.memory_space<smem>>) -> (i32, i32) {
    %c0_i32 = arith.constant 0 : i32
    %c0_i32_0 = arith.constant 0 : i32
    %c0_i32_1 = arith.constant 0 : i32
    return %c0_i32, %c0_i32_0 : i32, i32
  }
  func.func @transform_2(%arg0: i32, %arg1: memref<1xi32, #tpu.memory_space<smem>>) -> (i32, i32) {
    %c0_i32 = arith.constant 0 : i32
    %c0_i32_0 = arith.constant 0 : i32
    %c0_i32_1 = arith.constant 0 : i32
    return %c0_i32, %c0_i32_0 : i32, i32
  }
  func.func @transform_3(%arg0: i32, %arg1: memref<1xi32, #tpu.memory_space<smem>>) -> (i32, i32) {
    %c0_i32 = arith.constant 0 : i32
    %c0_i32_0 = arith.constant 0 : i32
    return %arg0, %c0_i32 : i32, i32
  }
}

</mosaic_0001>

<llo_original>
// kernel: tpu_custom_call.1
$region0: #{tpu_custom_call.1}
  #allocation0 [shape = 'u32[]', space=smem, size = 0x4, offset = 0x4, fixed_abs, tag = 'smem constant byte address 0x4 - core index']
  #allocation1 [shape = 'u32[144,128]{1,0:T(1,128)}', space=vmem, size = 0x12000, scoped, tag = 'internal scratch']
  #allocation2 [shape = 's32[1]{0}', space=sflag, size = 0x4, scoped, tag = 'scoped memory for tpu_custom_call.1']
  #allocation3 [shape = 's32[1]{0:T(128)S(6)}', space=smem, size = 0x200, scoped, tag = 'prefetched SMEM operand 0']
  %s0 = inlined_call_operand.<no memory space> [shape: s32[1], index: 0, kind: input, shape index: {}]
  %s1 = inlined_call_operand.hbm [shape: f32[12,32], index: 1, kind: input, shape index: {}]
  %s2 = inlined_call_operand.hbm [shape: f32[32,32], index: 2, kind: input, shape index: {}]
  %s3 = inlined_call_operand.vmem [shape: f32[1,32], index: 3, kind: input, shape index: {}]
  %s4 = inlined_call_operand.hbm [shape: f32[12,32], index: 4, kind: output, shape index: {}]
  %s5 = sld [smem:[#allocation0]]
  $region30: #{tpu_custom_call.1} parent=0
    _
  %s7 = ssub.s32 1, %s5
  %s8 = scalar_select 0, %s7, %s5
  %9 = sst [smem:[#allocation3]] %s0
  $region1: #{tpu_custom_call.1} parent=0
    #allocation4 [shape = 'u8[8192]{0}', space=vmem, size = 0x2000, scoped, tag = 'input window, operand 1, single buffered']
    #allocation5 [shape = 's32[1]{0}', space=sflag, size = 0x4, scoped, tag = 'scoped memory for tpu_custom_call.1']
    #allocation6 [shape = 's32[1]{0}', space=sflag, size = 0x4, scoped, tag = 'scoped memory for tpu_custom_call.1']
    #allocation7 [shape = 'u8[16384]{0}', space=vmem, size = 0x4000, scoped, tag = 'input window, operand 2, single buffered']
    #allocation8 [shape = 's32[1]{0}', space=sflag, size = 0x4, scoped, tag = 'scoped memory for tpu_custom_call.1']
    #allocation9 [shape = 'u8[8192]{0}', space=vmem, size = 0x2000, scoped, tag = 'output window, operand 0, single buffered']
    %10 = vsyncpa [#allocation5], 0
    %11 = vsyncpa [#allocation8], 0
    %12 = vsyncpa [#allocation6], 0
    // Predicated region
    $region2: #{tpu_custom_call.1} parent=1 // pred_check
      _
    $region3: #{tpu_custom_call.1} parent=1 // pred_check_branch
      %14 = sbr.rel (0) target = $region5
    $region4: #{tpu_custom_call.1} parent=1 // pred_region
      %s16 = ssub.s32 256, 256
      %17 = vsyncadd [#allocation5], %s16
      %s18 = sshll.u32 [#allocation4], 4
      %s19 = int_to_ptr.vmem [resolvable:$true] %s18
      %24 = dma.hbm_to_vmem [thread:$0]  %s1, 256, %s19, [#allocation5], 128, 128, 8
    $region5: #{tpu_custom_call.1} parent=1 // pred_fallthru
      _
    // Predicated region
    $region6: #{tpu_custom_call.1} parent=1 // pred_check
      _
    $region7: #{tpu_custom_call.1} parent=1 // pred_check_branch
      %26 = sbr.rel (0) target = $region9
    $region8: #{tpu_custom_call.1} parent=1 // pred_region
      %s28 = ssub.s32 512, 512
      %29 = vsyncadd [#allocation8], %s28
      %s30 = sshll.u32 [#allocation7], 4
      %s31 = int_to_ptr.vmem [resolvable:$true] %s30
      %36 = dma.hbm_to_vmem [thread:$0]  %s2, 512, %s31, [#allocation8], 128, 128, 8
    $region9: #{tpu_custom_call.1} parent=1 // pred_fallthru
      _
    // Predicated region
    $region10: #{tpu_custom_call.1} parent=1 // pred_check
      _
    $region11: #{tpu_custom_call.1} parent=1 // pred_check_branch
      %38 = sbr.rel (0) target = $region13
    $region12: #{tpu_custom_call.1} parent=1 // pred_region
      _
    $region13: #{tpu_custom_call.1} parent=1 // pred_fallthru
      _
    // Predicated region
    $region14: #{tpu_custom_call.1} parent=1 // pred_check
      _
    $region15: #{tpu_custom_call.1} parent=1 // pred_check_branch
      %40 = sbr.rel (0) target = $region17
    $region16: #{tpu_custom_call.1} parent=1 // pred_region
      %41 = dma.done [#allocation5], 256
    $region17: #{tpu_custom_call.1} parent=1 // pred_fallthru
      _
    // Predicated region
    $region18: #{tpu_custom_call.1} parent=1 // pred_check
      _
    $region19: #{tpu_custom_call.1} parent=1 // pred_check_branch
      %43 = sbr.rel (0) target = $region21
    $region20: #{tpu_custom_call.1} parent=1 // pred_region
      %44 = dma.done [#allocation8], 512
    $region21: #{tpu_custom_call.1} parent=1 // pred_fallthru
      _
    %v45 = vld [vmem:[#allocation4] sm:$0xff]
    %v46 = vld [vmem:[#allocation4 + $0x8] sm:$0xff]
    %v47 = vld [vmem:[#allocation7] sm:$0xff]
    %v48 = vld [vmem:[#allocation7 + $0x8] sm:$0xff]
    %v49 = vld [vmem:[#allocation7 + $0x10] sm:$0xff]
    %v50 = vld [vmem:[#allocation7 + $0x18] sm:$0xff]
    %v51 = vld [vmem:[%s3] sm:$0x1]
    %v53 = vlaneseq
    %v54 = vshrl.u32 %v53, 7
    %v55 = vsub.s32 0, %v54
    %v56 = vrot.slane %v51, %v55
    %vm58 = vcmask 261120
    %v60 = vsel %vm58, %v45, 0
    %v63 = vsel %vm58, %v46, 0
    %65 = vmatprep.subr.mxu0 0.0
    %66 = vmatpush1.msra.mxu0 0.0
    %67 = vmatprep.subr.mxu0 0.0
    %68 = vmatpush1.msra.mxu0 0.0
    %69 = vmatprep.subr.mxu0 0.0
    %70 = vmatpush1.msra.mxu0 0.0
    %71 = vmatprep.subr.mxu0 0.0
    %72 = vmatpush1.msra.mxu0 0.0
    %73 = vmatprep.subr.mxu0 0.0
    %74 = vmatpush1.msra.mxu0 0.0
    %75 = vmatprep.subr.mxu0 0.0
    %76 = vmatpush1.msra.mxu0 0.0
    %77 = vmatprep.subr.mxu0 0.0
    %78 = vmatpush1.msra.mxu0 0.0
    %79 = vmatprep.subr.mxu0 0.0
    %80 = vmatpush1.msra.mxu0 0.0
    %81 = vmatprep.subr.mxu0 0.0
    %82 = vmatpush1.msra.mxu0 0.0
    %83 = vmatprep.subr.mxu0 0.0
    %84 = vmatpush1.msra.mxu0 0.0
    %85 = vmatprep.subr.mxu0 0.0
    %86 = vmatpush1.msra.mxu0 0.0
    %87 = vmatprep.subr.mxu0 0.0
    %88 = vmatpush1.msra.mxu0 0.0
    %89 = vmatprep.subr.mxu0 0.0
    %90 = vmatpush1.msra.mxu0 %v50
    %91 = vmatprep.subr.mxu0 0.0
    %92 = vmatpush1.msra.mxu0 %v49
    %93 = vmatprep.subr.mxu0 0.0
    %94 = vmatpush1.msra.mxu0 %v48
    %95 = vmatprep.subr.mxu0 0.0
    %96 = vmatpush1.msra.mxu0 %v47
    %97 = vmatprep.subr.mxu0 0.0
    %98 = vmatpush2.msra.mxu0 0.0
    %99 = vmatprep.subr.mxu0 0.0
    %100 = vmatpush2.msra.mxu0 0.0
    %101 = vmatprep.subr.mxu0 0.0
    %102 = vmatpush2.msra.mxu0 0.0
    %103 = vmatprep.subr.mxu0 0.0
    %104 = vmatpush2.msra.mxu0 0.0
    %105 = vmatprep.subr.mxu0 0.0
    %106 = vmatpush2.msra.mxu0 0.0
    %107 = vmatprep.subr.mxu0 0.0
    %108 = vmatpush2.msra.mxu0 0.0
    %109 = vmatprep.subr.mxu0 0.0
    %110 = vmatpush2.msra.mxu0 0.0
    %111 = vmatprep.subr.mxu0 0.0
    %112 = vmatpush2.msra.mxu0 0.0
    %113 = vmatprep.subr.mxu0 0.0
    %114 = vmatpush2.msra.mxu0 0.0
    %115 = vmatprep.subr.mxu0 0.0
    %116 = vmatpush2.msra.mxu0 0.0
    %117 = vmatprep.subr.mxu0 0.0
    %118 = vmatpush2.msra.mxu0 0.0
    %119 = vmatprep.subr.mxu0 0.0
    %120 = vmatpush2.msra.mxu0 0.0
    %121 = vmatprep.subr.mxu0 0.0
    %122 = vmatpush2.msra.mxu0 0.0
    %123 = vmatprep.subr.mxu0 0.0
    %124 = vmatpush2.msra.mxu0 0.0
    %125 = vmatprep.subr.mxu0 0.0
    %126 = vmatpush2.msra.mxu0 0.0
    %127 = vmatprep.subr.mxu0 0.0
    %128 = vmatpush2.msra.mxu0 0.0
    %129 = vmatprep.mubr.f32.mxu0 0.0
    %130 = vmatmul.mubr.f32.gmra.mxu0 %v60
    %v131 = vpop.f32.mrf.mxu0
    %v132 = vadd.f32 %v56, %v131
    %v133 = vpop.f32.mrf.mxu0
    %134 = vmatprep.mubr.f32.mxu0 0.0
    %135 = vmatmul.mubr.f32.gmra.mxu0 %v63
    %v136 = vpop.f32.mrf.mxu0
    %v137 = vadd.f32 %v56, %v136
    %v138 = vpop.f32.mrf.mxu0
    %139 = vdwg.mxu0
    %140 = vst.msk [vmem:[#allocation9] sm:$0xff] %vm58, %v132
    %141 = vst.msk [vmem:[#allocation9 + $0x8] sm:$0xff] %vm58, %v137
    // Predicated region
    $region22: #{tpu_custom_call.1} parent=1 // pred_check
      _
    $region23: #{tpu_custom_call.1} parent=1 // pred_check_branch
      %143 = sbr.rel (0) target = $region25
    $region24: #{tpu_custom_call.1} parent=1 // pred_region
      %s145 = ssub.s32 256, 256
      %146 = vsyncadd [#allocation6], %s145
      %s147 = sshll.u32 [#allocation9], 4
      %s148 = int_to_ptr.vmem [resolvable:$true] %s147
      %153 = dma.vmem_to_hbm [thread:$0]  %s148, 256, %s4, [#allocation6], 128, 128, 8
    $region25: #{tpu_custom_call.1} parent=1 // pred_fallthru
      _
    // Predicated region
    $region26: #{tpu_custom_call.1} parent=1 // pred_check
      _
    $region27: #{tpu_custom_call.1} parent=1 // pred_check_branch
      %155 = sbr.rel (0) target = $region29
    $region28: #{tpu_custom_call.1} parent=1 // pred_region
      %156 = dma.done [#allocation6], 256
    $region29: #{tpu_custom_call.1} parent=1 // pred_fallthru
      _
    %157 = vsyncpa [#allocation5], 1
    %158 = vsyncpa [#allocation8], 1
    %159 = vsyncpa [#allocation6], 1

</llo_original>
